<compile_context>
chip_gen: v5e
topology: v5e:2x2
jax: 0.10.0
libtpu: 0.0.40
codegen_flags: <defaults>
</compile_context>

<pallas_src>
import math
from functools import partial

import jax
import jax.numpy as jnp
from jax import lax
from jax.experimental import pallas as pl
from jax.experimental.pallas import tpu as pltpu


# ---------------------------------------------------------------------------
# Fully fused kernel: QKV projections + multi-head attention + output proj.
# One grid step per batch element.
# ---------------------------------------------------------------------------
def _mha_fused_kernel(*refs, nhead, head_dim, scale, has_mask):
    if has_mask:
        (q_ref, k_ref, v_ref, m_ref,
         wq_ref, wk_ref, wv_ref, wo_ref,
         bq_ref, bk_ref, bv_ref, bo_ref, o_ref) = refs
    else:
        (q_ref, k_ref, v_ref,
         wq_ref, wk_ref, wv_ref, wo_ref,
         bq_ref, bk_ref, bv_ref, bo_ref, o_ref) = refs
        m_ref = None

    in_dtype = q_ref.dtype
    q_in = q_ref[0]                        # (S, D)
    k_in = k_ref[0]                        # (L, D)
    v_in = v_ref[0]                        # (L, D)

    # In-kernel Q/K/V projections: lane-dense (., D) MXU matmuls, f32 accumulate.
    # The 1/sqrt(head_dim) scale is folded into q (S*D elements, not S*L scores).
    q = ((jnp.dot(q_in, wq_ref[...], preferred_element_type=jnp.float32)
          + bq_ref[...]) * scale).astype(in_dtype)
    k = (jnp.dot(k_in, wk_ref[...], preferred_element_type=jnp.float32)
         + bk_ref[...]).astype(in_dtype)
    v = (jnp.dot(v_in, wv_ref[...], preferred_element_type=jnp.float32)
         + bv_ref[...]).astype(in_dtype)

    neg_big = jnp.float32(-1e9)
    outs = []
    for h in range(nhead):                 # static unroll over heads
        lo = h * head_dim
        q_h = q[:, lo:lo + head_dim]       # (S, hd)
        k_h = k[:, lo:lo + head_dim]       # (L, hd)
        v_h = v[:, lo:lo + head_dim]       # (L, hd)

        # scores = q_h @ k_h^T without materializing a transpose.
        s = lax.dot_general(q_h, k_h, (((1,), (1,)), ((), ())),
                            preferred_element_type=jnp.float32)   # (S, L)
        if has_mask:
            s = jnp.where(m_ref[0] == 0, neg_big, s)               # masked_fill
        s = s - s.max(axis=-1, keepdims=True)
        p = jnp.exp(s)
        p = p * pl.reciprocal(p.sum(axis=-1, keepdims=True), approx=True)

        # PV matmul in the input dtype (no upcast of v), f32 accumulate.
        outs.append(jnp.dot(p.astype(v_h.dtype), v_h,
                            preferred_element_type=jnp.float32))   # (S, hd)

    # Concatenate heads once -> lane-dense (S, D), feed straight into the
    # fused output projection.  Final store is a single lane-dense (S, D).
    ctx = jnp.concatenate(outs, axis=-1).astype(in_dtype)           # (S, D)
    out = (jnp.dot(ctx, wo_ref[...], preferred_element_type=jnp.float32)
           + bo_ref[...])                                           # (S, D) f32
    o_ref[0] = out.astype(o_ref.dtype)


def multi_head_attn(params, query, key, value, mask=None, *, nhead):
    """
    query: (B, S, D), key/value: (B, L, D), mask: (B, S, L) or None
    params: dict with wq, bq, wk, bk, wv, bv, wo, bo  (wX: (D, D), bX: (D,))
    returns: (B, S, D)
    """
    B, S, D = query.shape
    L = key.shape[1]
    assert D % nhead == 0
    head_dim = D // nhead
    scale = 1.0 / math.sqrt(head_dim)
    has_mask = mask is not None

    bq = params["bq"].reshape(1, D)
    bk = params["bk"].reshape(1, D)
    bv = params["bv"].reshape(1, D)
    bo = params["bo"].reshape(1, D)

    batch_blk = lambda b: (b, 0, 0)
    whole_2d = lambda b: (0, 0)

    flops = B * (4 * S * D * D + 4 * L * D * D + 4 * S * L * D)
    bytes_accessed = 4 * (2 * B * S * D + 2 * B * L * D
                          + (B * S * L if has_mask else 0)
                          + 4 * D * D + 4 * D)
    cost = pl.CostEstimate(flops=flops,
                           transcendentals=B * nhead * S * (L + 1),
                           bytes_accessed=bytes_accessed)

    in_specs = [
        pl.BlockSpec((1, S, D), batch_blk),          # query
        pl.BlockSpec((1, L, D), batch_blk),          # key
        pl.BlockSpec((1, L, D), batch_blk),          # value
    ]
    operands = [query, key, value]
    if has_mask:
        mask_i32 = mask.reshape(B, S, L).astype(jnp.int32)
        in_specs.append(pl.BlockSpec((1, S, L), batch_blk))   # mask: one DMA/batch
        operands.append(mask_i32)
    in_specs += [
        pl.BlockSpec((D, D), whole_2d),              # wq
        pl.BlockSpec((D, D), whole_2d),              # wk
        pl.BlockSpec((D, D), whole_2d),              # wv
        pl.BlockSpec((D, D), whole_2d),              # wo
        pl.BlockSpec((1, D), whole_2d),              # bq
        pl.BlockSpec((1, D), whole_2d),              # bk
        pl.BlockSpec((1, D), whole_2d),              # bv
        pl.BlockSpec((1, D), whole_2d),              # bo
    ]
    operands += [params["wq"], params["wk"], params["wv"], params["wo"],
                 bq, bk, bv, bo]

    return pl.pallas_call(
        partial(_mha_fused_kernel, nhead=nhead, head_dim=head_dim,
                scale=scale, has_mask=has_mask),
        out_shape=jax.ShapeDtypeStruct((B, S, D), query.dtype),
        grid=(B,),
        in_specs=in_specs,
        out_specs=pl.BlockSpec((1, S, D), batch_blk),
        compiler_params=pltpu.CompilerParams(
            dimension_semantics=("parallel",),          # >=2 blocks -> both TCs on v7x
            vmem_limit_bytes=32 * 1024 * 1024),         # safe on v5e/v6e/v7x
        cost_estimate=cost,
    )(*operands)


def init_params(key, dim):
    """Deterministic parameter init (PyTorch-Linear-style uniform)."""
    bound = 1.0 / math.sqrt(dim)
    keys = jax.random.split(key, 8)
    u = lambda k, shape: jax.random.uniform(k, shape, jnp.float32, -bound, bound)
    return {
        "wq": u(keys[0], (dim, dim)), "bq": u(keys[1], (dim,)),
        "wk": u(keys[2], (dim, dim)), "bk": u(keys[3], (dim,)),
        "wv": u(keys[4], (dim, dim)), "bv": u(keys[5], (dim,)),
        "wo": u(keys[6], (dim, dim)), "bo": u(keys[7], (dim,)),
    }


def _reference(params, query, key, value, mask, nhead):
    """Pure-JAX reference mirroring the PyTorch forward (eval mode)."""
    B, S, D = query.shape
    hd = D // nhead

    def proj(x, w, b):
        y = x @ w + b
        return jnp.transpose(y.reshape(B, -1, nhead, hd), (0, 2, 1, 3))

    q = proj(query, params["wq"], params["bq"])
    k = proj(key, params["wk"], params["bk"])
    v = proj(value, params["wv"], params["bv"])
    scores = (q @ jnp.swapaxes(k, -1, -2)) / math.sqrt(hd)
    if mask is not None:
        scores = jnp.where(mask[:, None, :, :] == 0, -1e9, scores)
    p = jax.nn.softmax(scores, axis=-1)
    r = p @ v
    r = jnp.transpose(r, (0, 2, 1, 3)).reshape(B, S, D)
    return r @ params["wo"] + params["bo"]


if __name__ == "__main__":
    B, S, L, D, H = 2, 8, 8, 32, 4

    root = jax.random.PRNGKey(0)
    kp, kq, kk, kv = jax.random.split(root, 4)

    params = init_params(kp, D)
    query = jax.random.normal(kq, (B, S, D), jnp.float32)
    key_in = jax.random.normal(kk, (B, L, D), jnp.float32)
    value = jax.random.normal(kv, (B, L, D), jnp.float32)
    # causal-style binary mask (B, S, L) — always at least one valid position/row
    mask = (jnp.arange(L)[None, None, :] <= jnp.arange(S)[None, :, None])
    mask = jnp.broadcast_to(mask, (B, S, L)).astype(jnp.int32)

    # masked path
    out = multi_head_attn(params, query, key_in, value, mask, nhead=H)
    out = jax.block_until_ready(out)
    ref = _reference(params, query, key_in, value, mask, H)
    assert out.shape == (B, S, D)
    # tolerance slightly looser than 1e-4 to cover the EUP approx-reciprocal
    # softmax normalization (accepted tradeoff)
    assert jnp.allclose(out, ref, atol=2e-3, rtol=2e-3)

    # unmasked path (mask input & masking ops compiled out)
    out_nm = multi_head_attn(params, query, key_in, value, None, nhead=H)
    out_nm = jax.block_until_ready(out_nm)
    ref_nm = _reference(params, query, key_in, value, None, H)
    assert jnp.allclose(out_nm, ref_nm, atol=2e-3, rtol=2e-3)

    print("KERNEL_OK")
</pallas_src>

<mosaic_0001>
module attributes {stable_mosaic.version = 11 : i64} {
  func.func @_mha_fused_kernel(%arg0: i32, %arg1: memref<1x8x32xf32, #tpu.memory_space<vmem>>, %arg2: memref<1x8x32xf32, #tpu.memory_space<vmem>>, %arg3: memref<1x8x32xf32, #tpu.memory_space<vmem>>, %arg4: memref<1x8x8xi32, #tpu.memory_space<vmem>>, %arg5: memref<32x32xf32, #tpu.memory_space<vmem>>, %arg6: memref<32x32xf32, #tpu.memory_space<vmem>>, %arg7: memref<32x32xf32, #tpu.memory_space<vmem>>, %arg8: memref<32x32xf32, #tpu.memory_space<vmem>>, %arg9: memref<1x32xf32, #tpu.memory_space<vmem>>, %arg10: memref<1x32xf32, #tpu.memory_space<vmem>>, %arg11: memref<1x32xf32, #tpu.memory_space<vmem>>, %arg12: memref<1x32xf32, #tpu.memory_space<vmem>>, %arg13: memref<1x8x32xf32, #tpu.memory_space<vmem>>) attributes {dimension_semantics = [#tpu.dimension_semantics<parallel>], iteration_bounds = array<i64: 2>, scalar_prefetch = 0 : i64, scratch_operands = 0 : i64, tpu.core_type = #tpu.core_type<tc>, window_params = [{transform_indices = @transform_0, window_bounds = array<i64: 1, 8, 32>}, {transform_indices = @transform_1, window_bounds = array<i64: 1, 8, 32>}, {transform_indices = @transform_2, window_bounds = array<i64: 1, 8, 32>}, {transform_indices = @transform_3, window_bounds = array<i64: 1, 8, 8>}, {pipeline_mode = #tpu.pipeline_mode<synchronous>, transform_indices = @transform_4, window_bounds = array<i64: 32, 32>}, {pipeline_mode = #tpu.pipeline_mode<synchronous>, transform_indices = @transform_5, window_bounds = array<i64: 32, 32>}, {pipeline_mode = #tpu.pipeline_mode<synchronous>, transform_indices = @transform_6, window_bounds = array<i64: 32, 32>}, {pipeline_mode = #tpu.pipeline_mode<synchronous>, transform_indices = @transform_7, window_bounds = array<i64: 32, 32>}, {pipeline_mode = #tpu.pipeline_mode<synchronous>, transform_indices = @transform_8, window_bounds = array<i64: 1, 32>}, {pipeline_mode = #tpu.pipeline_mode<synchronous>, transform_indices = @transform_9, window_bounds = array<i64: 1, 32>}, {pipeline_mode = #tpu.pipeline_mode<synchronous>, transform_indices = @transform_10, window_bounds = array<i64: 1, 32>}, {pipeline_mode = #tpu.pipeline_mode<synchronous>, transform_indices = @transform_11, window_bounds = array<i64: 1, 32>}, {transform_indices = @transform_12, window_bounds = array<i64: 1, 8, 32>}]} {
    %c0 = arith.constant 0 : index
    %c0_0 = arith.constant 0 : index
    %c0_1 = arith.constant 0 : index
    %0 = vector.load %arg1[%c0, %c0_0, %c0_1] : memref<1x8x32xf32, #tpu.memory_space<vmem>>, vector<1x8x32xf32>
    %1 = vector.shape_cast %0 : vector<1x8x32xf32> to vector<8x32xf32>
    %c0_2 = arith.constant 0 : index
    %c0_3 = arith.constant 0 : index
    %c0_4 = arith.constant 0 : index
    %2 = vector.load %arg2[%c0_2, %c0_3, %c0_4] : memref<1x8x32xf32, #tpu.memory_space<vmem>>, vector<1x8x32xf32>
    %3 = vector.shape_cast %2 : vector<1x8x32xf32> to vector<8x32xf32>
    %c0_5 = arith.constant 0 : index
    %c0_6 = arith.constant 0 : index
    %c0_7 = arith.constant 0 : index
    %4 = vector.load %arg3[%c0_5, %c0_6, %c0_7] : memref<1x8x32xf32, #tpu.memory_space<vmem>>, vector<1x8x32xf32>
    %5 = vector.shape_cast %4 : vector<1x8x32xf32> to vector<8x32xf32>
    %c0_8 = arith.constant 0 : index
    %c0_9 = arith.constant 0 : index
    %6 = vector.load %arg5[%c0_8, %c0_9] : memref<32x32xf32, #tpu.memory_space<vmem>>, vector<32x32xf32>
    %cst = arith.constant dense<0.000000e+00> : vector<8x32xf32>
    %7 = tpu.matmul %1, %6, %cst {dimension_numbers = #tpu.dot_dimension_numbers<[1], [0], [0], [1], [0, 0, 1, 1], [], []>} : vector<8x32xf32>, vector<32x32xf32>, vector<8x32xf32> -> vector<8x32xf32>
    %c0_10 = arith.constant 0 : index
    %c0_11 = arith.constant 0 : index
    %8 = vector.load %arg9[%c0_10, %c0_11] : memref<1x32xf32, #tpu.memory_space<vmem>>, vector<1x32xf32>
    %9 = vector.broadcast %8 : vector<1x32xf32> to vector<8x32xf32>
    %10 = arith.addf %7, %9 : vector<8x32xf32>
    %cst_12 = arith.constant 0.353553385 : f32
    %11 = vector.broadcast %cst_12 : f32 to vector<8x32xf32>
    %12 = arith.mulf %10, %11 : vector<8x32xf32>
    %c0_13 = arith.constant 0 : index
    %c0_14 = arith.constant 0 : index
    %13 = vector.load %arg6[%c0_13, %c0_14] : memref<32x32xf32, #tpu.memory_space<vmem>>, vector<32x32xf32>
    %cst_15 = arith.constant dense<0.000000e+00> : vector<8x32xf32>
    %14 = tpu.matmul %3, %13, %cst_15 {dimension_numbers = #tpu.dot_dimension_numbers<[1], [0], [0], [1], [0, 0, 1, 1], [], []>} : vector<8x32xf32>, vector<32x32xf32>, vector<8x32xf32> -> vector<8x32xf32>
    %c0_16 = arith.constant 0 : index
    %c0_17 = arith.constant 0 : index
    %15 = vector.load %arg10[%c0_16, %c0_17] : memref<1x32xf32, #tpu.memory_space<vmem>>, vector<1x32xf32>
    %16 = vector.broadcast %15 : vector<1x32xf32> to vector<8x32xf32>
    %17 = arith.addf %14, %16 : vector<8x32xf32>
    %c0_18 = arith.constant 0 : index
    %c0_19 = arith.constant 0 : index
    %18 = vector.load %arg7[%c0_18, %c0_19] : memref<32x32xf32, #tpu.memory_space<vmem>>, vector<32x32xf32>
    %cst_20 = arith.constant dense<0.000000e+00> : vector<8x32xf32>
    %19 = tpu.matmul %5, %18, %cst_20 {dimension_numbers = #tpu.dot_dimension_numbers<[1], [0], [0], [1], [0, 0, 1, 1], [], []>} : vector<8x32xf32>, vector<32x32xf32>, vector<8x32xf32> -> vector<8x32xf32>
    %c0_21 = arith.constant 0 : index
    %c0_22 = arith.constant 0 : index
    %20 = vector.load %arg11[%c0_21, %c0_22] : memref<1x32xf32, #tpu.memory_space<vmem>>, vector<1x32xf32>
    %21 = vector.broadcast %20 : vector<1x32xf32> to vector<8x32xf32>
    %22 = arith.addf %19, %21 : vector<8x32xf32>
    %23 = vector.extract_strided_slice %12 {offsets = [0, 0], sizes = [8, 8], strides = [1, 1]} : vector<8x32xf32> to vector<8x8xf32>
    %24 = vector.extract_strided_slice %17 {offsets = [0, 0], sizes = [8, 8], strides = [1, 1]} : vector<8x32xf32> to vector<8x8xf32>
    %25 = vector.extract_strided_slice %22 {offsets = [0, 0], sizes = [8, 8], strides = [1, 1]} : vector<8x32xf32> to vector<8x8xf32>
    %cst_23 = arith.constant dense<0.000000e+00> : vector<8x8xf32>
    %26 = tpu.matmul %23, %24, %cst_23 {dimension_numbers = #tpu.dot_dimension_numbers<[1], [1], [0], [0], [0, 0, 1, 0], [], []>} : vector<8x8xf32>, vector<8x8xf32>, vector<8x8xf32> -> vector<8x8xf32>
    %c0_24 = arith.constant 0 : index
    %c0_25 = arith.constant 0 : index
    %c0_26 = arith.constant 0 : index
    %27 = vector.load %arg4[%c0_24, %c0_25, %c0_26] : memref<1x8x8xi32, #tpu.memory_space<vmem>>, vector<1x8x8xi32>
    %28 = vector.shape_cast %27 : vector<1x8x8xi32> to vector<8x8xi32>
    %c0_i32 = arith.constant 0 : i32
    %29 = vector.broadcast %c0_i32 : i32 to vector<8x8xi32>
    %30 = arith.cmpi eq, %28, %29 : vector<8x8xi32>
    %cst_27 = arith.constant -1.000000e+09 : f32
    %31 = vector.broadcast %cst_27 : f32 to vector<8x8xf32>
    %32 = arith.select %30, %31, %26 : vector<8x8xi1>, vector<8x8xf32>
    %cst_28 = arith.constant dense<0xFF800000> : vector<8xf32>
    %33 = vector.multi_reduction <maximumf>, %32, %cst_28 [1] : vector<8x8xf32> to vector<8xf32>
    %34 = vector.shape_cast %33 : vector<8xf32> to vector<8x1xf32>
    %35 = vector.broadcast %34 : vector<8x1xf32> to vector<8x8xf32>
    %36 = arith.subf %32, %35 : vector<8x8xf32>
    %37 = math.exp %36 : vector<8x8xf32>
    %cst_29 = arith.constant dense<0.000000e+00> : vector<8xf32>
    %38 = vector.multi_reduction <add>, %37, %cst_29 [1] : vector<8x8xf32> to vector<8xf32>
    %39 = vector.shape_cast %38 : vector<8xf32> to vector<8x1xf32>
    %40 = tpu.reciprocal %39 {approx = true} : vector<8x1xf32> -> vector<8x1xf32>
    %41 = vector.broadcast %40 : vector<8x1xf32> to vector<8x8xf32>
    %42 = arith.mulf %37, %41 : vector<8x8xf32>
    %cst_30 = arith.constant dense<0.000000e+00> : vector<8x8xf32>
    %43 = tpu.matmul %42, %25, %cst_30 {dimension_numbers = #tpu.dot_dimension_numbers<[1], [0], [0], [1], [0, 0, 1, 1], [], []>} : vector<8x8xf32>, vector<8x8xf32>, vector<8x8xf32> -> vector<8x8xf32>
    %44 = vector.extract_strided_slice %12 {offsets = [0, 8], sizes = [8, 8], strides = [1, 1]} : vector<8x32xf32> to vector<8x8xf32>
    %45 = vector.extract_strided_slice %17 {offsets = [0, 8], sizes = [8, 8], strides = [1, 1]} : vector<8x32xf32> to vector<8x8xf32>
    %46 = vector.extract_strided_slice %22 {offsets = [0, 8], sizes = [8, 8], strides = [1, 1]} : vector<8x32xf32> to vector<8x8xf32>
    %cst_31 = arith.constant dense<0.000000e+00> : vector<8x8xf32>
    %47 = tpu.matmul %44, %45, %cst_31 {dimension_numbers = #tpu.dot_dimension_numbers<[1], [1], [0], [0], [0, 0, 1, 0], [], []>} : vector<8x8xf32>, vector<8x8xf32>, vector<8x8xf32> -> vector<8x8xf32>
    %c0_32 = arith.constant 0 : index
    %c0_33 = arith.constant 0 : index
    %c0_34 = arith.constant 0 : index
    %48 = vector.load %arg4[%c0_32, %c0_33, %c0_34] : memref<1x8x8xi32, #tpu.memory_space<vmem>>, vector<1x8x8xi32>
    %49 = vector.shape_cast %48 : vector<1x8x8xi32> to vector<8x8xi32>
    %c0_i32_35 = arith.constant 0 : i32
    %50 = vector.broadcast %c0_i32_35 : i32 to vector<8x8xi32>
    %51 = arith.cmpi eq, %49, %50 : vector<8x8xi32>
    %cst_36 = arith.constant -1.000000e+09 : f32
    %52 = vector.broadcast %cst_36 : f32 to vector<8x8xf32>
    %53 = arith.select %51, %52, %47 : vector<8x8xi1>, vector<8x8xf32>
    %cst_37 = arith.constant dense<0xFF800000> : vector<8xf32>
    %54 = vector.multi_reduction <maximumf>, %53, %cst_37 [1] : vector<8x8xf32> to vector<8xf32>
    %55 = vector.shape_cast %54 : vector<8xf32> to vector<8x1xf32>
    %56 = vector.broadcast %55 : vector<8x1xf32> to vector<8x8xf32>
    %57 = arith.subf %53, %56 : vector<8x8xf32>
    %58 = math.exp %57 : vector<8x8xf32>
    %cst_38 = arith.constant dense<0.000000e+00> : vector<8xf32>
    %59 = vector.multi_reduction <add>, %58, %cst_38 [1] : vector<8x8xf32> to vector<8xf32>
    %60 = vector.shape_cast %59 : vector<8xf32> to vector<8x1xf32>
    %61 = tpu.reciprocal %60 {approx = true} : vector<8x1xf32> -> vector<8x1xf32>
    %62 = vector.broadcast %61 : vector<8x1xf32> to vector<8x8xf32>
    %63 = arith.mulf %58, %62 : vector<8x8xf32>
    %cst_39 = arith.constant dense<0.000000e+00> : vector<8x8xf32>
    %64 = tpu.matmul %63, %46, %cst_39 {dimension_numbers = #tpu.dot_dimension_numbers<[1], [0], [0], [1], [0, 0, 1, 1], [], []>} : vector<8x8xf32>, vector<8x8xf32>, vector<8x8xf32> -> vector<8x8xf32>
    %65 = vector.extract_strided_slice %12 {offsets = [0, 16], sizes = [8, 8], strides = [1, 1]} : vector<8x32xf32> to vector<8x8xf32>
    %66 = vector.extract_strided_slice %17 {offsets = [0, 16], sizes = [8, 8], strides = [1, 1]} : vector<8x32xf32> to vector<8x8xf32>
    %67 = vector.extract_strided_slice %22 {offsets = [0, 16], sizes = [8, 8], strides = [1, 1]} : vector<8x32xf32> to vector<8x8xf32>
    %cst_40 = arith.constant dense<0.000000e+00> : vector<8x8xf32>
    %68 = tpu.matmul %65, %66, %cst_40 {dimension_numbers = #tpu.dot_dimension_numbers<[1], [1], [0], [0], [0, 0, 1, 0], [], []>} : vector<8x8xf32>, vector<8x8xf32>, vector<8x8xf32> -> vector<8x8xf32>
    %c0_41 = arith.constant 0 : index
    %c0_42 = arith.constant 0 : index
    %c0_43 = arith.constant 0 : index
    %69 = vector.load %arg4[%c0_41, %c0_42, %c0_43] : memref<1x8x8xi32, #tpu.memory_space<vmem>>, vector<1x8x8xi32>
    %70 = vector.shape_cast %69 : vector<1x8x8xi32> to vector<8x8xi32>
    %c0_i32_44 = arith.constant 0 : i32
    %71 = vector.broadcast %c0_i32_44 : i32 to vector<8x8xi32>
    %72 = arith.cmpi eq, %70, %71 : vector<8x8xi32>
    %cst_45 = arith.constant -1.000000e+09 : f32
    %73 = vector.broadcast %cst_45 : f32 to vector<8x8xf32>
    %74 = arith.select %72, %73, %68 : vector<8x8xi1>, vector<8x8xf32>
    %cst_46 = arith.constant dense<0xFF800000> : vector<8xf32>
    %75 = vector.multi_reduction <maximumf>, %74, %cst_46 [1] : vector<8x8xf32> to vector<8xf32>
    %76 = vector.shape_cast %75 : vector<8xf32> to vector<8x1xf32>
    %77 = vector.broadcast %76 : vector<8x1xf32> to vector<8x8xf32>
    %78 = arith.subf %74, %77 : vector<8x8xf32>
    %79 = math.exp %78 : vector<8x8xf32>
    %cst_47 = arith.constant dense<0.000000e+00> : vector<8xf32>
    %80 = vector.multi_reduction <add>, %79, %cst_47 [1] : vector<8x8xf32> to vector<8xf32>
    %81 = vector.shape_cast %80 : vector<8xf32> to vector<8x1xf32>
    %82 = tpu.reciprocal %81 {approx = true} : vector<8x1xf32> -> vector<8x1xf32>
    %83 = vector.broadcast %82 : vector<8x1xf32> to vector<8x8xf32>
    %84 = arith.mulf %79, %83 : vector<8x8xf32>
    %cst_48 = arith.constant dense<0.000000e+00> : vector<8x8xf32>
    %85 = tpu.matmul %84, %67, %cst_48 {dimension_numbers = #tpu.dot_dimension_numbers<[1], [0], [0], [1], [0, 0, 1, 1], [], []>} : vector<8x8xf32>, vector<8x8xf32>, vector<8x8xf32> -> vector<8x8xf32>
    %86 = vector.extract_strided_slice %12 {offsets = [0, 24], sizes = [8, 8], strides = [1, 1]} : vector<8x32xf32> to vector<8x8xf32>
    %87 = vector.extract_strided_slice %17 {offsets = [0, 24], sizes = [8, 8], strides = [1, 1]} : vector<8x32xf32> to vector<8x8xf32>
    %88 = vector.extract_strided_slice %22 {offsets = [0, 24], sizes = [8, 8], strides = [1, 1]} : vector<8x32xf32> to vector<8x8xf32>
    %cst_49 = arith.constant dense<0.000000e+00> : vector<8x8xf32>
    %89 = tpu.matmul %86, %87, %cst_49 {dimension_numbers = #tpu.dot_dimension_numbers<[1], [1], [0], [0], [0, 0, 1, 0], [], []>} : vector<8x8xf32>, vector<8x8xf32>, vector<8x8xf32> -> vector<8x8xf32>
    %c0_50 = arith.constant 0 : index
    %c0_51 = arith.constant 0 : index
    %c0_52 = arith.constant 0 : index
    %90 = vector.load %arg4[%c0_50, %c0_51, %c0_52] : memref<1x8x8xi32, #tpu.memory_space<vmem>>, vector<1x8x8xi32>
    %91 = vector.shape_cast %90 : vector<1x8x8xi32> to vector<8x8xi32>
    %c0_i32_53 = arith.constant 0 : i32
    %92 = vector.broadcast %c0_i32_53 : i32 to vector<8x8xi32>
    %93 = arith.cmpi eq, %91, %92 : vector<8x8xi32>
    %cst_54 = arith.constant -1.000000e+09 : f32
    %94 = vector.broadcast %cst_54 : f32 to vector<8x8xf32>
    %95 = arith.select %93, %94, %89 : vector<8x8xi1>, vector<8x8xf32>
    %cst_55 = arith.constant dense<0xFF800000> : vector<8xf32>
    %96 = vector.multi_reduction <maximumf>, %95, %cst_55 [1] : vector<8x8xf32> to vector<8xf32>
    %97 = vector.shape_cast %96 : vector<8xf32> to vector<8x1xf32>
    %98 = vector.broadcast %97 : vector<8x1xf32> to vector<8x8xf32>
    %99 = arith.subf %95, %98 : vector<8x8xf32>
    %100 = math.exp %99 : vector<8x8xf32>
    %cst_56 = arith.constant dense<0.000000e+00> : vector<8xf32>
    %101 = vector.multi_reduction <add>, %100, %cst_56 [1] : vector<8x8xf32> to vector<8xf32>
    %102 = vector.shape_cast %101 : vector<8xf32> to vector<8x1xf32>
    %103 = tpu.reciprocal %102 {approx = true} : vector<8x1xf32> -> vector<8x1xf32>
    %104 = vector.broadcast %103 : vector<8x1xf32> to vector<8x8xf32>
    %105 = arith.mulf %100, %104 : vector<8x8xf32>
    %cst_57 = arith.constant dense<0.000000e+00> : vector<8x8xf32>
    %106 = tpu.matmul %105, %88, %cst_57 {dimension_numbers = #tpu.dot_dimension_numbers<[1], [0], [0], [1], [0, 0, 1, 1], [], []>} : vector<8x8xf32>, vector<8x8xf32>, vector<8x8xf32> -> vector<8x8xf32>
    %107 = tpu.concatenate %43, %64, %85, %106 in 1 : vector<8x8xf32>, vector<8x8xf32>, vector<8x8xf32>, vector<8x8xf32> -> vector<8x32xf32>
    %c0_58 = arith.constant 0 : index
    %c0_59 = arith.constant 0 : index
    %108 = vector.load %arg8[%c0_58, %c0_59] : memref<32x32xf32, #tpu.memory_space<vmem>>, vector<32x32xf32>
    %cst_60 = arith.constant dense<0.000000e+00> : vector<8x32xf32>
    %109 = tpu.matmul %107, %108, %cst_60 {dimension_numbers = #tpu.dot_dimension_numbers<[1], [0], [0], [1], [0, 0, 1, 1], [], []>} : vector<8x32xf32>, vector<32x32xf32>, vector<8x32xf32> -> vector<8x32xf32>
    %c0_61 = arith.constant 0 : index
    %c0_62 = arith.constant 0 : index
    %110 = vector.load %arg12[%c0_61, %c0_62] : memref<1x32xf32, #tpu.memory_space<vmem>>, vector<1x32xf32>
    %111 = vector.broadcast %110 : vector<1x32xf32> to vector<8x32xf32>
    %112 = arith.addf %109, %111 : vector<8x32xf32>
    %c0_63 = arith.constant 0 : index
    %c0_64 = arith.constant 0 : index
    %c0_65 = arith.constant 0 : index
    %113 = vector.load %arg13[%c0_63, %c0_64, %c0_65] : memref<1x8x32xf32, #tpu.memory_space<vmem>>, vector<1x8x32xf32>
    %114 = vector.shape_cast %113 : vector<1x8x32xf32> to vector<8x32xf32>
    %115 = vector.shape_cast %112 : vector<8x32xf32> to vector<1x8x32xf32>
    tpu.vector_store %arg13[%c0_63, %c0_64, %c0_65], %115 {strides = array<i32>} : memref<1x8x32xf32, #tpu.memory_space<vmem>>, vector<1x8x32xf32>,
    return
  }
  func.func @transform_0(%arg0: i32) -> (i32, i32, i32) {
    %c0_i32 = arith.constant 0 : i32
    %c0_i32_0 = arith.constant 0 : i32
    %c0_i32_1 = arith.constant 0 : i32
    return %arg0, %c0_i32, %c0_i32_0 : i32, i32, i32
  }
  func.func @transform_1(%arg0: i32) -> (i32, i32, i32) {
    %c0_i32 = arith.constant 0 : i32
    %c0_i32_0 = arith.constant 0 : i32
    %c0_i32_1 = arith.constant 0 : i32
    return %arg0, %c0_i32, %c0_i32_0 : i32, i32, i32
  }
  func.func @transform_2(%arg0: i32) -> (i32, i32, i32) {
    %c0_i32 = arith.constant 0 : i32
    %c0_i32_0 = arith.constant 0 : i32
    %c0_i32_1 = arith.constant 0 : i32
    return %arg0, %c0_i32, %c0_i32_0 : i32, i32, i32
  }
  func.func @transform_3(%arg0: i32) -> (i32, i32, i32) {
    %c0_i32 = arith.constant 0 : i32
    %c0_i32_0 = arith.constant 0 : i32
    %c0_i32_1 = arith.constant 0 : i32
    return %arg0, %c0_i32, %c0_i32_0 : i32, i32, i32
  }
  func.func @transform_4(%arg0: i32) -> (i32, i32) {
    %c0_i32 = arith.constant 0 : i32
    %c0_i32_0 = arith.constant 0 : i32
    %c0_i32_1 = arith.constant 0 : i32
    return %c0_i32, %c0_i32_0 : i32, i32
  }
  func.func @transform_5(%arg0: i32) -> (i32, i32) {
    %c0_i32 = arith.constant 0 : i32
    %c0_i32_0 = arith.constant 0 : i32
    %c0_i32_1 = arith.constant 0 : i32
    return %c0_i32, %c0_i32_0 : i32, i32
  }
  func.func @transform_6(%arg0: i32) -> (i32, i32) {
    %c0_i32 = arith.constant 0 : i32
    %c0_i32_0 = arith.constant 0 : i32
    %c0_i32_1 = arith.constant 0 : i32
    return %c0_i32, %c0_i32_0 : i32, i32
  }
  func.func @transform_7(%arg0: i32) -> (i32, i32) {
    %c0_i32 = arith.constant 0 : i32
    %c0_i32_0 = arith.constant 0 : i32
    %c0_i32_1 = arith.constant 0 : i32
    return %c0_i32, %c0_i32_0 : i32, i32
  }
  func.func @transform_8(%arg0: i32) -> (i32, i32) {
    %c0_i32 = arith.constant 0 : i32
    %c0_i32_0 = arith.constant 0 : i32
    %c0_i32_1 = arith.constant 0 : i32
    return %c0_i32, %c0_i32_0 : i32, i32
  }
  func.func @transform_9(%arg0: i32) -> (i32, i32) {
    %c0_i32 = arith.constant 0 : i32
    %c0_i32_0 = arith.constant 0 : i32
    %c0_i32_1 = arith.constant 0 : i32
    return %c0_i32, %c0_i32_0 : i32, i32
  }
  func.func @transform_10(%arg0: i32) -> (i32, i32) {
    %c0_i32 = arith.constant 0 : i32
    %c0_i32_0 = arith.constant 0 : i32
    %c0_i32_1 = arith.constant 0 : i32
    return %c0_i32, %c0_i32_0 : i32, i32
  }
  func.func @transform_11(%arg0: i32) -> (i32, i32) {
    %c0_i32 = arith.constant 0 : i32
    %c0_i32_0 = arith.constant 0 : i32
    %c0_i32_1 = arith.constant 0 : i32
    return %c0_i32, %c0_i32_0 : i32, i32
  }
  func.func @transform_12(%arg0: i32) -> (i32, i32, i32) {
    %c0_i32 = arith.constant 0 : i32
    %c0_i32_0 = arith.constant 0 : i32
    %c0_i32_1 = arith.constant 0 : i32
    return %arg0, %c0_i32, %c0_i32_0 : i32, i32, i32
  }
}

</mosaic_0001>

<llo_original>
// kernel: tpu_custom_call.1
$region0: #{tpu_custom_call.1}
  #allocation0 [shape = 'u32[]', space=smem, size = 0x4, offset = 0x4, fixed_abs, tag = 'smem constant byte address 0x4 - core index']
  #allocation1 [shape = 'u32[72,128]{1,0:T(1,128)}', space=vmem, size = 0x9000, scoped, tag = 'internal scratch']
  %s0 = inlined_call_operand.hbm [shape: f32[2,8,32], index: 0, kind: input, shape index: {}]
  %s1 = inlined_call_operand.hbm [shape: f32[2,8,32], index: 1, kind: input, shape index: {}]
  %s2 = inlined_call_operand.hbm [shape: f32[2,8,32], index: 2, kind: input, shape index: {}]
  %s3 = inlined_call_operand.hbm [shape: s32[2,8,8], index: 3, kind: input, shape index: {}]
  %s4 = inlined_call_operand.hbm [shape: f32[32,32], index: 4, kind: input, shape index: {}]
  %s5 = inlined_call_operand.hbm [shape: f32[32,32], index: 5, kind: input, shape index: {}]
  %s6 = inlined_call_operand.hbm [shape: f32[32,32], index: 6, kind: input, shape index: {}]
  %s7 = inlined_call_operand.hbm [shape: f32[32,32], index: 7, kind: input, shape index: {}]
  %s8 = inlined_call_operand.vmem [shape: f32[1,32], index: 8, kind: input, shape index: {}]
  %s9 = inlined_call_operand.vmem [shape: f32[1,32], index: 9, kind: input, shape index: {}]
  %s10 = inlined_call_operand.vmem [shape: f32[1,32], index: 10, kind: input, shape index: {}]
  %s11 = inlined_call_operand.vmem [shape: f32[1,32], index: 11, kind: input, shape index: {}]
  %s12 = inlined_call_operand.hbm [shape: f32[2,8,32], index: 12, kind: output, shape index: {}]
  %s13 = sld [smem:[#allocation0]]
  $region113: #{tpu_custom_call.1} parent=0
    _
  %s15 = ssub.s32 1, %s13
  %s16 = scalar_select 0, %s15, %s13
  $region1: #{tpu_custom_call.1} parent=0
    #allocation2 [shape = 'u8[8192]{0}', space=vmem, size = 0x2000, scoped, tag = 'input window, operand 0']
    #allocation3 [shape = 's32[2]{0}', space=sflag, size = 0x8, scoped, tag = 'scoped memory for tpu_custom_call.1']
    #allocation4 [shape = 's32[2]{0}', space=sflag, size = 0x8, scoped, tag = 'scoped memory for tpu_custom_call.1']
    #allocation5 [shape = 'u8[8192]{0}', space=vmem, size = 0x2000, scoped, tag = 'input window, operand 1']
    #allocation6 [shape = 's32[2]{0}', space=sflag, size = 0x8, scoped, tag = 'scoped memory for tpu_custom_call.1']
    #allocation7 [shape = 'u8[8192]{0}', space=vmem, size = 0x2000, scoped, tag = 'input window, operand 2']
    #allocation8 [shape = 'u8[8192]{0}', space=vmem, size = 0x2000, scoped, tag = 'input window, operand 3']
    #allocation9 [shape = 's32[2]{0}', space=sflag, size = 0x8, scoped, tag = 'scoped memory for tpu_custom_call.1']
    #allocation10 [shape = 'u8[16384]{0}', space=vmem, size = 0x4000, scoped, tag = 'input window, operand 4, single buffered']
    #allocation11 [shape = 'u8[16384]{0}', space=vmem, size = 0x4000, scoped, tag = 'input window, operand 5, single buffered']
    #allocation12 [shape = 's32[1]{0}', space=sflag, size = 0x4, scoped, tag = 'scoped memory for tpu_custom_call.1']
    #allocation13 [shape = 'u8[16384]{0}', space=vmem, size = 0x4000, scoped, tag = 'input window, operand 6, single buffered']
    #allocation14 [shape = 'u8[16384]{0}', space=vmem, size = 0x4000, scoped, tag = 'input window, operand 7, single buffered']
    #allocation15 [shape = 's32[1]{0}', space=sflag, size = 0x4, scoped, tag = 'scoped memory for tpu_custom_call.1']
    #allocation16 [shape = 'u8[8192]{0}', space=vmem, size = 0x2000, scoped, tag = 'output window, operand 0']
    %17 = vsyncpa [#allocation3], 0
    %s18 = scalar_lea.sflag [#allocation3], 1
    %19 = vsyncpa %s18, 0
    %20 = vsyncpa [#allocation6], 0
    %s21 = scalar_lea.sflag [#allocation6], 1
    %22 = vsyncpa %s21, 0
    %23 = vsyncpa [#allocation9], 0
    %s24 = scalar_lea.sflag [#allocation9], 1
    %25 = vsyncpa %s24, 0
    %26 = vsyncpa [#allocation12], 0
    %27 = vsyncpa [#allocation15], 0
    %28 = vsyncpa [#allocation4], 0
    %s29 = scalar_lea.sflag [#allocation4], 1
    %30 = vsyncpa %s29, 0
    loop: start=0, step=1, limit=4
    $region2: #{tpu_custom_call.1} parent=1 // loop_pre_header
      _
    $region3: #{tpu_custom_call.1} parent=1 // loop_header
      %s32 = sphi 0, %s36
      %p33 = scmp.ge.s32.totalorder %s32, 4
      %s42 = sphi 0, %s44
      %s45 = sphi 0, %s42
      %s46 = sphi 0, %s45
      %s62 = sphi 0, %s46
      %s68 = sphi 0, %s70
      %s71 = sphi 0, %s68
      %s72 = sphi 0, %s71
      %s88 = sphi 0, %s72
      %s94 = sphi 0, %s96
      %s97 = sphi 0, %s94
      %s98 = sphi 0, %s97
      %s114 = sphi 0, %s98
      %s120 = sphi 0, %s122
      %s123 = sphi 0, %s120
      %s124 = sphi 0, %s123
      %s140 = sphi 0, %s124
      %s144 = sphi 0, %s144
      %s146 = sphi 0, %s144
      %s147 = sphi 0, %s146
      %s161 = sphi 0, %s147
      %s165 = sphi 0, %s165
      %s167 = sphi 0, %s165
      %s168 = sphi 0, %s167
      %s182 = sphi 0, %s168
      %s186 = sphi 0, %s186
      %s188 = sphi 0, %s186
      %s189 = sphi 0, %s188
      %s203 = sphi 0, %s189
      %s207 = sphi 0, %s207
      %s209 = sphi 0, %s207
      %s210 = sphi 0, %s209
      %s224 = sphi 0, %s210
      %s228 = sphi 0, %s228
      %s230 = sphi 0, %s228
      %s231 = sphi 0, %s230
      %s245 = sphi 0, %s231
      %s249 = sphi 0, %s249
      %s251 = sphi 0, %s249
      %s252 = sphi 0, %s251
      %s266 = sphi 0, %s252
      %s270 = sphi 0, %s270
      %s272 = sphi 0, %s270
      %s273 = sphi 0, %s272
      %s287 = sphi 0, %s273
      %s291 = sphi 0, %s291
      %s293 = sphi 0, %s291
      %s294 = sphi 0, %s293
      %s308 = sphi 0, %s294
      %s314 = sphi 0, %s316
      %s317 = sphi 0, %s314
      %s318 = sphi 0, %s317
      %s334 = sphi 0, %s318
    $region4: #{tpu_custom_call.1} parent=1 // loop_header_branch
      %35 = sbr.rel (%p33) target = $region8
    $region5: #{tpu_custom_call.1} parent=1 // loop_body
      %s37 = ssub.s32 %s32, 1
      %s38 = ssub.s32 %s32, 2
      %s39 = sadd.s32 %s32, 1
      %s40 = ssub.s32 %s32, %s39
      %p41 = scmp.eq.s32.totalorder %s40, 0
      %s43 = sadd.s32 %s42, 1
      %s44 = scalar_select %p41, %s42, %s43
      %p47 = pneg %p41
      %p48 = scmp.eq.s32.totalorder %s32, 1
      %p49 = por %p47, %p48
      %p50 = scmp.ne.s32.totalorder %s42, %s45
      %p51 = scmp.eq.s32.totalorder %s32, 0
      %p52 = por %p50, %p51
      %p53 = scmp.ne.s32.totalorder %s42, %s45
      %p54 = scmp.eq.s32.totalorder %s37, 1
      %p55 = por %p53, %p54
      %p56 = scmp.ne.s32.totalorder %s45, %s46
      %p57 = scmp.eq.s32.totalorder %s37, 0
      %p58 = por %p56, %p57
      %p59 = scmp.ne.s32.totalorder %s45, %s46
      %p60 = scmp.eq.s32.totalorder %s38, 1
      %p61 = por %p59, %p60
      %p63 = scmp.ne.s32.totalorder %s46, %s62
      %p64 = scmp.eq.s32.totalorder %s38, 0
      %p65 = por %p63, %p64
      %s66 = ssub.s32 %s32, %s39
      %p67 = scmp.eq.s32.totalorder %s66, 0
      %s69 = sadd.s32 %s68, 1
      %s70 = scalar_select %p67, %s68, %s69
      %p73 = pneg %p67
      %p74 = scmp.eq.s32.totalorder %s32, 1
      %p75 = por %p73, %p74
      %p76 = scmp.ne.s32.totalorder %s68, %s71
      %p77 = scmp.eq.s32.totalorder %s32, 0
      %p78 = por %p76, %p77
      %p79 = scmp.ne.s32.totalorder %s68, %s71
      %p80 = scmp.eq.s32.totalorder %s37, 1
      %p81 = por %p79, %p80
      %p82 = scmp.ne.s32.totalorder %s71, %s72
      %p83 = scmp.eq.s32.totalorder %s37, 0
      %p84 = por %p82, %p83
      %p85 = scmp.ne.s32.totalorder %s71, %s72
      %p86 = scmp.eq.s32.totalorder %s38, 1
      %p87 = por %p85, %p86
      %p89 = scmp.ne.s32.totalorder %s72, %s88
      %p90 = scmp.eq.s32.totalorder %s38, 0
      %p91 = por %p89, %p90
      %s92 = ssub.s32 %s32, %s39
      %p93 = scmp.eq.s32.totalorder %s92, 0
      %s95 = sadd.s32 %s94, 1
      %s96 = scalar_select %p93, %s94, %s95
      %p99 = pneg %p93
      %p100 = scmp.eq.s32.totalorder %s32, 1
      %p101 = por %p99, %p100
      %p102 = scmp.ne.s32.totalorder %s94, %s97
      %p103 = scmp.eq.s32.totalorder %s32, 0
      %p104 = por %p102, %p103
      %p105 = scmp.ne.s32.totalorder %s94, %s97
      %p106 = scmp.eq.s32.totalorder %s37, 1
      %p107 = por %p105, %p106
      %p108 = scmp.ne.s32.totalorder %s97, %s98
      %p109 = scmp.eq.s32.totalorder %s37, 0
      %p110 = por %p108, %p109
      %p111 = scmp.ne.s32.totalorder %s97, %s98
      %p112 = scmp.eq.s32.totalorder %s38, 1
      %p113 = por %p111, %p112
      %p115 = scmp.ne.s32.totalorder %s98, %s114
      %p116 = scmp.eq.s32.totalorder %s38, 0
      %p117 = por %p115, %p116
      %s118 = ssub.s32 %s32, %s39
      %p119 = scmp.eq.s32.totalorder %s118, 0
      %s121 = sadd.s32 %s120, 1
      %s122 = scalar_select %p119, %s120, %s121
      %p125 = pneg %p119
      %p126 = scmp.eq.s32.totalorder %s32, 1
      %p127 = por %p125, %p126
      %p128 = scmp.ne.s32.totalorder %s120, %s123
      %p129 = scmp.eq.s32.totalorder %s32, 0
      %p130 = por %p128, %p129
      %p131 = scmp.ne.s32.totalorder %s120, %s123
      %p132 = scmp.eq.s32.totalorder %s37, 1
      %p133 = por %p131, %p132
      %p134 = scmp.ne.s32.totalorder %s123, %s124
      %p135 = scmp.eq.s32.totalorder %s37, 0
      %p136 = por %p134, %p135
      %p137 = scmp.ne.s32.totalorder %s123, %s124
      %p138 = scmp.eq.s32.totalorder %s38, 1
      %p139 = por %p137, %p138
      %p141 = scmp.ne.s32.totalorder %s124, %s140
      %p142 = scmp.eq.s32.totalorder %s38, 0
      %p143 = por %p141, %p142
      %s145 = sadd.s32 %s144, 1
      %p148 = scmp.eq.s32.totalorder %s32, 1
      %p149 = scmp.ne.s32.totalorder %s144, %s146
      %p150 = scmp.eq.s32.totalorder %s32, 0
      %p151 = por %p149, %p150
      %p152 = scmp.ne.s32.totalorder %s144, %s146
      %p153 = scmp.eq.s32.totalorder %s37, 1
      %p154 = por %p152, %p153
      %p155 = scmp.ne.s32.totalorder %s146, %s147
      %p156 = scmp.eq.s32.totalorder %s37, 0
      %p157 = por %p155, %p156
      %p158 = scmp.ne.s32.totalorder %s146, %s147
      %p159 = scmp.eq.s32.totalorder %s38, 1
      %p160 = por %p158, %p159
      %p162 = scmp.ne.s32.totalorder %s147, %s161
      %p163 = scmp.eq.s32.totalorder %s38, 0
      %p164 = por %p162, %p163
      %s166 = sadd.s32 %s165, 1
      %p169 = scmp.eq.s32.totalorder %s32, 1
      %p170 = scmp.ne.s32.totalorder %s165, %s167
      %p171 = scmp.eq.s32.totalorder %s32, 0
      %p172 = por %p170, %p171
      %p173 = scmp.ne.s32.totalorder %s165, %s167
      %p174 = scmp.eq.s32.totalorder %s37, 1
      %p175 = por %p173, %p174
      %p176 = scmp.ne.s32.totalorder %s167, %s168
      %p177 = scmp.eq.s32.totalorder %s37, 0
      %p178 = por %p176, %p177
      %p179 = scmp.ne.s32.totalorder %s167, %s168
      %p180 = scmp.eq.s32.totalorder %s38, 1
      %p181 = por %p179, %p180
      %p183 = scmp.ne.s32.totalorder %s168, %s182
      %p184 = scmp.eq.s32.totalorder %s38, 0
      %p185 = por %p183, %p184
      %s187 = sadd.s32 %s186, 1
      %p190 = scmp.eq.s32.totalorder %s32, 1
      %p191 = scmp.ne.s32.totalorder %s186, %s188
      %p192 = scmp.eq.s32.totalorder %s32, 0
      %p193 = por %p191, %p192
      %p194 = scmp.ne.s32.totalorder %s186, %s188
      %p195 = scmp.eq.s32.totalorder %s37, 1
      %p196 = por %p194, %p195
      %p197 = scmp.ne.s32.totalorder %s188, %s189
      %p198 = scmp.eq.s32.totalorder %s37, 0
      %p199 = por %p197, %p198
      %p200 = scmp.ne.s32.totalorder %s188, %s189
      %p201 = scmp.eq.s32.totalorder %s38, 1
      %p202 = por %p200, %p201
      %p204 = scmp.ne.s32.totalorder %s189, %s203
      %p205 = scmp.eq.s32.totalorder %s38, 0
      %p206 = por %p204, %p205
      %s208 = sadd.s32 %s207, 1
      %p211 = scmp.eq.s32.totalorder %s32, 1
      %p212 = scmp.ne.s32.totalorder %s207, %s209
      %p213 = scmp.eq.s32.totalorder %s32, 0
      %p214 = por %p212, %p213
      %p215 = scmp.ne.s32.totalorder %s207, %s209
      %p216 = scmp.eq.s32.totalorder %s37, 1
      %p217 = por %p215, %p216
      %p218 = scmp.ne.s32.totalorder %s209, %s210
      %p219 = scmp.eq.s32.totalorder %s37, 0
      %p220 = por %p218, %p219
      %p221 = scmp.ne.s32.totalorder %s209, %s210
      %p222 = scmp.eq.s32.totalorder %s38, 1
      %p223 = por %p221, %p222
      %p225 = scmp.ne.s32.totalorder %s210, %s224
      %p226 = scmp.eq.s32.totalorder %s38, 0
      %p227 = por %p225, %p226
      %s229 = sadd.s32 %s228, 1
      %p232 = scmp.eq.s32.totalorder %s32, 1
      %p233 = scmp.ne.s32.totalorder %s228, %s230
      %p234 = scmp.eq.s32.totalorder %s32, 0
      %p235 = por %p233, %p234
      %p236 = scmp.ne.s32.totalorder %s228, %s230
      %p237 = scmp.eq.s32.totalorder %s37, 1
      %p238 = por %p236, %p237
      %p239 = scmp.ne.s32.totalorder %s230, %s231
      %p240 = scmp.eq.s32.totalorder %s37, 0
      %p241 = por %p239, %p240
      %p242 = scmp.ne.s32.totalorder %s230, %s231
      %p243 = scmp.eq.s32.totalorder %s38, 1
      %p244 = por %p242, %p243
      %p246 = scmp.ne.s32.totalorder %s231, %s245
      %p247 = scmp.eq.s32.totalorder %s38, 0
      %p248 = por %p246, %p247
      %s250 = sadd.s32 %s249, 1
      %p253 = scmp.eq.s32.totalorder %s32, 1
      %p254 = scmp.ne.s32.totalorder %s249, %s251
      %p255 = scmp.eq.s32.totalorder %s32, 0
      %p256 = por %p254, %p255
      %p257 = scmp.ne.s32.totalorder %s249, %s251
      %p258 = scmp.eq.s32.totalorder %s37, 1
      %p259 = por %p257, %p258
      %p260 = scmp.ne.s32.totalorder %s251, %s252
      %p261 = scmp.eq.s32.totalorder %s37, 0
      %p262 = por %p260, %p261
      %p263 = scmp.ne.s32.totalorder %s251, %s252
      %p264 = scmp.eq.s32.totalorder %s38, 1
      %p265 = por %p263, %p264
      %p267 = scmp.ne.s32.totalorder %s252, %s266
      %p268 = scmp.eq.s32.totalorder %s38, 0
      %p269 = por %p267, %p268
      %s271 = sadd.s32 %s270, 1
      %p274 = scmp.eq.s32.totalorder %s32, 1
      %p275 = scmp.ne.s32.totalorder %s270, %s272
      %p276 = scmp.eq.s32.totalorder %s32, 0
      %p277 = por %p275, %p276
      %p278 = scmp.ne.s32.totalorder %s270, %s272
      %p279 = scmp.eq.s32.totalorder %s37, 1
      %p280 = por %p278, %p279
      %p281 = scmp.ne.s32.totalorder %s272, %s273
      %p282 = scmp.eq.s32.totalorder %s37, 0
      %p283 = por %p281, %p282
      %p284 = scmp.ne.s32.totalorder %s272, %s273
      %p285 = scmp.eq.s32.totalorder %s38, 1
      %p286 = por %p284, %p285
      %p288 = scmp.ne.s32.totalorder %s273, %s287
      %p289 = scmp.eq.s32.totalorder %s38, 0
      %p290 = por %p288, %p289
      %s292 = sadd.s32 %s291, 1
      %p295 = scmp.eq.s32.totalorder %s32, 1
      %p296 = scmp.ne.s32.totalorder %s291, %s293
      %p297 = scmp.eq.s32.totalorder %s32, 0
      %p298 = por %p296, %p297
      %p299 = scmp.ne.s32.totalorder %s291, %s293
      %p300 = scmp.eq.s32.totalorder %s37, 1
      %p301 = por %p299, %p300
      %p302 = scmp.ne.s32.totalorder %s293, %s294
      %p303 = scmp.eq.s32.totalorder %s37, 0
      %p304 = por %p302, %p303
      %p305 = scmp.ne.s32.totalorder %s293, %s294
      %p306 = scmp.eq.s32.totalorder %s38, 1
      %p307 = por %p305, %p306
      %p309 = scmp.ne.s32.totalorder %s294, %s308
      %p310 = scmp.eq.s32.totalorder %s38, 0
      %p311 = por %p309, %p310
      %s312 = ssub.s32 %s32, %s39
      %p313 = scmp.eq.s32.totalorder %s312, 0
      %s315 = sadd.s32 %s314, 1
      %s316 = scalar_select %p313, %s314, %s315
      %p319 = pneg %p313
      %p320 = scmp.eq.s32.totalorder %s32, 1
      %p321 = por %p319, %p320
      %p322 = scmp.ne.s32.totalorder %s314, %s317
      %p323 = scmp.eq.s32.totalorder %s32, 0
      %p324 = por %p322, %p323
      %p325 = scmp.ne.s32.totalorder %s314, %s317
      %p326 = scmp.eq.s32.totalorder %s37, 1
      %p327 = por %p325, %p326
      %p328 = scmp.ne.s32.totalorder %s317, %s318
      %p329 = scmp.eq.s32.totalorder %s37, 0
      %p330 = por %p328, %p329
      %p331 = scmp.ne.s32.totalorder %s317, %s318
      %p332 = scmp.eq.s32.totalorder %s38, 1
      %p333 = por %p331, %p332
      %p335 = scmp.ne.s32.totalorder %s318, %s334
      %p336 = scmp.eq.s32.totalorder %s38, 0
      %p337 = por %p335, %p336
      %p338 = scmp.le.s32.totalorder 1, %s32
      %p339 = scmp.lt.s32.totalorder %s32, 3
      %p340 = pnand %p338, %p339
      %p341 = pneg %p340
      // Predicated region
      $region9: #{tpu_custom_call.1} parent=5 // pred_check
        _
      $region10: #{tpu_custom_call.1} parent=5 // pred_check_branch
        %343 = sbr.rel (%p340) target = $region12
      $region11: #{tpu_custom_call.1} parent=5 // pred_region
        %s344 = ssub.s32 %s32, 1
        // Predicated region
        $region13: #{tpu_custom_call.1} parent=11 // pred_check
          %p345 = pneg %p157
        $region14: #{tpu_custom_call.1} parent=11 // pred_check_branch
          %347 = sbr.rel (%p345) target = $region16
        $region15: #{tpu_custom_call.1} parent=11 // pred_region
          %349 = vsyncadd [#allocation9], 0
          %s350 = sshll.u32 %s4, 4
          %s351 = int_to_ptr.hbm [resolvable:$true] %s350
          %s352 = sshll.u32 [#allocation10], 4
          %s353 = int_to_ptr.vmem [resolvable:$true] %s352
          %358 = dma.hbm_to_vmem [thread:$0]  %s351, 512, %s353, [#allocation9], 128, 128, 8
        $region16: #{tpu_custom_call.1} parent=11 // pred_fallthru
          _
        // Predicated region
        $region17: #{tpu_custom_call.1} parent=11 // pred_check
          %p359 = pneg %p178
        $region18: #{tpu_custom_call.1} parent=11 // pred_check_branch
          %361 = sbr.rel (%p359) target = $region20
        $region19: #{tpu_custom_call.1} parent=11 // pred_region
          %363 = vsyncadd [#allocation12], 0
          %s364 = sshll.u32 %s5, 4
          %s365 = int_to_ptr.hbm [resolvable:$true] %s364
          %s366 = sshll.u32 [#allocation11], 4
          %s367 = int_to_ptr.vmem [resolvable:$true] %s366
          %372 = dma.hbm_to_vmem [thread:$0]  %s365, 512, %s367, [#allocation12], 128, 128, 8
        $region20: #{tpu_custom_call.1} parent=11 // pred_fallthru
          _
        // Predicated region
        $region21: #{tpu_custom_call.1} parent=11 // pred_check
          %p373 = pneg %p199
        $region22: #{tpu_custom_call.1} parent=11 // pred_check_branch
          %375 = sbr.rel (%p373) target = $region24
        $region23: #{tpu_custom_call.1} parent=11 // pred_region
          %377 = vsyncadd [#allocation12], 0
          %s378 = sshll.u32 %s6, 4
          %s379 = int_to_ptr.hbm [resolvable:$true] %s378
          %s380 = sshll.u32 [#allocation13], 4
          %s381 = int_to_ptr.vmem [resolvable:$true] %s380
          %386 = dma.hbm_to_vmem [thread:$0]  %s379, 512, %s381, [#allocation12], 128, 128, 8
        $region24: #{tpu_custom_call.1} parent=11 // pred_fallthru
          _
        // Predicated region
        $region25: #{tpu_custom_call.1} parent=11 // pred_check
          %p387 = pneg %p220
        $region26: #{tpu_custom_call.1} parent=11 // pred_check_branch
          %389 = sbr.rel (%p387) target = $region28
        $region27: #{tpu_custom_call.1} parent=11 // pred_region
          %391 = vsyncadd [#allocation15], 0
          %s392 = sshll.u32 %s7, 4
          %s393 = int_to_ptr.hbm [resolvable:$true] %s392
          %s394 = sshll.u32 [#allocation14], 4
          %s395 = int_to_ptr.vmem [resolvable:$true] %s394
          %400 = dma.hbm_to_vmem [thread:$0]  %s393, 512, %s395, [#allocation15], 128, 128, 8
        $region28: #{tpu_custom_call.1} parent=11 // pred_fallthru
          _
        // Predicated region
        $region29: #{tpu_custom_call.1} parent=11 // pred_check
          %p401 = pneg %p241
        $region30: #{tpu_custom_call.1} parent=11 // pred_check_branch
          %403 = sbr.rel (%p401) target = $region32
        $region31: #{tpu_custom_call.1} parent=11 // pred_region
          _
        $region32: #{tpu_custom_call.1} parent=11 // pred_fallthru
          _
        // Predicated region
        $region33: #{tpu_custom_call.1} parent=11 // pred_check
          %p404 = pneg %p262
        $region34: #{tpu_custom_call.1} parent=11 // pred_check_branch
          %406 = sbr.rel (%p404) target = $region36
        $region35: #{tpu_custom_call.1} parent=11 // pred_region
          _
        $region36: #{tpu_custom_call.1} parent=11 // pred_fallthru
          _
        // Predicated region
        $region37: #{tpu_custom_call.1} parent=11 // pred_check
          %p407 = pneg %p283
        $region38: #{tpu_custom_call.1} parent=11 // pred_check_branch
          %409 = sbr.rel (%p407) target = $region40
        $region39: #{tpu_custom_call.1} parent=11 // pred_region
          _
        $region40: #{tpu_custom_call.1} parent=11 // pred_fallthru
          _
        // Predicated region
        $region41: #{tpu_custom_call.1} parent=11 // pred_check
          %p410 = pneg %p304
        $region42: #{tpu_custom_call.1} parent=11 // pred_check_branch
          %412 = sbr.rel (%p410) target = $region44
        $region43: #{tpu_custom_call.1} parent=11 // pred_region
          _
        $region44: #{tpu_custom_call.1} parent=11 // pred_fallthru
          _
      $region12: #{tpu_custom_call.1} parent=5 // pred_fallthru
        _
      %p413 = scmp.lt.s32.totalorder %s32, 2
      // Predicated region
      $region45: #{tpu_custom_call.1} parent=5 // pred_check
        %p414 = pneg %p413
      $region46: #{tpu_custom_call.1} parent=5 // pred_check_branch
        %416 = sbr.rel (%p414) target = $region48
      $region47: #{tpu_custom_call.1} parent=5 // pred_region
        // Predicated region
        $region49: #{tpu_custom_call.1} parent=47 // pred_check
          %p417 = pneg %p52
        $region50: #{tpu_custom_call.1} parent=47 // pred_check_branch
          %419 = sbr.rel (%p417) target = $region52
        $region51: #{tpu_custom_call.1} parent=47 // pred_region
          %s420 = sand.u32 %s42, 1
          %s421 = scalar_lea.sflag [#allocation3], %s420
          %s422 = sand.u32 %s42, 1
          %s423 = smul.addr %s422, 8
          %s424 = scalar_lea.vmem [#allocation2], %s423
          %426 = vsyncadd %s421, 0
          %s427 = smul.addr %s32, 8
          %s428 = scalar_lea.hbm %s0, %s427
          %s430 = sshll.u32 %s428, 4
          %s431 = int_to_ptr.hbm [resolvable:$true] %s430
          %s432 = sshll.u32 %s424, 4
          %s433 = int_to_ptr.vmem [resolvable:$true] %s432
          %435 = dma.hbm_to_vmem [thread:$0]  %s431, 128, %s433, %s421
        $region52: #{tpu_custom_call.1} parent=47 // pred_fallthru
          _
        // Predicated region
        $region53: #{tpu_custom_call.1} parent=47 // pred_check
          %p436 = pneg %p78
        $region54: #{tpu_custom_call.1} parent=47 // pred_check_branch
          %438 = sbr.rel (%p436) target = $region56
        $region55: #{tpu_custom_call.1} parent=47 // pred_region
          %s439 = sand.u32 %s32, 1
          %s440 = scalar_lea.sflag [#allocation6], %s439
          %s441 = sand.u32 %s68, 1
          %s442 = smul.addr %s441, 8
          %s443 = scalar_lea.vmem [#allocation5], %s442
          %445 = vsyncadd %s440, 0
          %s446 = smul.addr %s32, 8
          %s447 = scalar_lea.hbm %s1, %s446
          %s449 = sshll.u32 %s447, 4
          %s450 = int_to_ptr.hbm [resolvable:$true] %s449
          %s451 = sshll.u32 %s443, 4
          %s452 = int_to_ptr.vmem [resolvable:$true] %s451
          %454 = dma.hbm_to_vmem [thread:$0]  %s450, 128, %s452, %s440
        $region56: #{tpu_custom_call.1} parent=47 // pred_fallthru
          _
        // Predicated region
        $region57: #{tpu_custom_call.1} parent=47 // pred_check
          %p455 = pneg %p104
        $region58: #{tpu_custom_call.1} parent=47 // pred_check_branch
          %457 = sbr.rel (%p455) target = $region60
        $region59: #{tpu_custom_call.1} parent=47 // pred_region
          %s458 = sand.u32 %s32, 1
          %s459 = scalar_lea.sflag [#allocation6], %s458
          %s460 = sand.u32 %s94, 1
          %s461 = smul.addr %s460, 8
          %s462 = scalar_lea.vmem [#allocation7], %s461
          %464 = vsyncadd %s459, 0
          %s465 = smul.addr %s32, 8
          %s466 = scalar_lea.hbm %s2, %s465
          %s468 = sshll.u32 %s466, 4
          %s469 = int_to_ptr.hbm [resolvable:$true] %s468
          %s470 = sshll.u32 %s462, 4
          %s471 = int_to_ptr.vmem [resolvable:$true] %s470
          %473 = dma.hbm_to_vmem [thread:$0]  %s469, 128, %s471, %s459
        $region60: #{tpu_custom_call.1} parent=47 // pred_fallthru
          _
        // Predicated region
        $region61: #{tpu_custom_call.1} parent=47 // pred_check
          %p474 = pneg %p130
        $region62: #{tpu_custom_call.1} parent=47 // pred_check_branch
          %476 = sbr.rel (%p474) target = $region64
        $region63: #{tpu_custom_call.1} parent=47 // pred_region
          %s477 = sand.u32 %s32, 1
          %s478 = scalar_lea.sflag [#allocation9], %s477
          %s479 = sand.u32 %s120, 1
          %s480 = smul.addr %s479, 8
          %s481 = scalar_lea.vmem [#allocation8], %s480
          %483 = vsyncadd %s478, 0
          %s484 = smul.addr %s32, 8
          %s485 = scalar_lea.hbm %s3, %s484
          %s487 = sshll.u32 %s485, 4
          %s488 = int_to_ptr.hbm [resolvable:$true] %s487
          %s489 = sshll.u32 %s481, 4
          %s490 = int_to_ptr.vmem [resolvable:$true] %s489
          %492 = dma.hbm_to_vmem [thread:$0]  %s488, 128, %s490, %s478
        $region64: #{tpu_custom_call.1} parent=47 // pred_fallthru
          _
      $region48: #{tpu_custom_call.1} parent=5 // pred_fallthru
        _
      %p493 = scmp.le.s32.totalorder 1, %s32
      %p494 = scmp.lt.s32.totalorder %s32, 3
      %p495 = pnand %p493, %p494
      %p496 = pneg %p495
      // Predicated region
      $region65: #{tpu_custom_call.1} parent=5 // pred_check
        _
      $region66: #{tpu_custom_call.1} parent=5 // pred_check_branch
        %498 = sbr.rel (%p495) target = $region68
      $region67: #{tpu_custom_call.1} parent=5 // pred_region
        %s499 = ssub.s32 %s32, 1
        %s500 = sand.u32 %s45, 1
        %s501 = scalar_lea.sflag [#allocation3], %s500
        %s502 = sand.u32 %s45, 1
        %s503 = smul.addr %s502, 8
        %s504 = scalar_lea.vmem [#allocation2], %s503
        // Predicated region
        $region69: #{tpu_custom_call.1} parent=67 // pred_check
          %p505 = pneg %p58
        $region70: #{tpu_custom_call.1} parent=67 // pred_check_branch
          %507 = sbr.rel (%p505) target = $region72
        $region71: #{tpu_custom_call.1} parent=67 // pred_region
          %509 = dma.done %s501, 128
        $region72: #{tpu_custom_call.1} parent=67 // pred_fallthru
          _
        %s510 = sand.u32 %s37, 1
        %s511 = scalar_lea.sflag [#allocation6], %s510
        %s512 = sand.u32 %s71, 1
        %s513 = smul.addr %s512, 8
        %s514 = scalar_lea.vmem [#allocation5], %s513
        // Predicated region
        $region73: #{tpu_custom_call.1} parent=67 // pred_check
          %p515 = pneg %p84
        $region74: #{tpu_custom_call.1} parent=67 // pred_check_branch
          %517 = sbr.rel (%p515) target = $region76
        $region75: #{tpu_custom_call.1} parent=67 // pred_region
          %519 = dma.done %s511, 128
        $region76: #{tpu_custom_call.1} parent=67 // pred_fallthru
          _
        %s520 = sand.u32 %s37, 1
        %s521 = scalar_lea.sflag [#allocation6], %s520
        %s522 = sand.u32 %s97, 1
        %s523 = smul.addr %s522, 8
        %s524 = scalar_lea.vmem [#allocation7], %s523
        // Predicated region
        $region77: #{tpu_custom_call.1} parent=67 // pred_check
          %p525 = pneg %p110
        $region78: #{tpu_custom_call.1} parent=67 // pred_check_branch
          %527 = sbr.rel (%p525) target = $region80
        $region79: #{tpu_custom_call.1} parent=67 // pred_region
          %529 = dma.done %s521, 128
        $region80: #{tpu_custom_call.1} parent=67 // pred_fallthru
          _
        %s530 = sand.u32 %s37, 1
        %s531 = scalar_lea.sflag [#allocation9], %s530
        %s532 = sand.u32 %s123, 1
        %s533 = smul.addr %s532, 8
        %s534 = scalar_lea.vmem [#allocation8], %s533
        // Predicated region
        $region81: #{tpu_custom_call.1} parent=67 // pred_check
          %p535 = pneg %p136
        $region82: #{tpu_custom_call.1} parent=67 // pred_check_branch
          %537 = sbr.rel (%p535) target = $region84
        $region83: #{tpu_custom_call.1} parent=67 // pred_region
          %539 = dma.done %s531, 128
        $region84: #{tpu_custom_call.1} parent=67 // pred_fallthru
          _
        // Predicated region
        $region85: #{tpu_custom_call.1} parent=67 // pred_check
          %p540 = pneg %p157
        $region86: #{tpu_custom_call.1} parent=67 // pred_check_branch
          %542 = sbr.rel (%p540) target = $region88
        $region87: #{tpu_custom_call.1} parent=67 // pred_region
          %544 = dma.done [#allocation9], 512
        $region88: #{tpu_custom_call.1} parent=67 // pred_fallthru
          _
        // Predicated region
        $region89: #{tpu_custom_call.1} parent=67 // pred_check
          %p545 = pneg %p178
        $region90: #{tpu_custom_call.1} parent=67 // pred_check_branch
          %547 = sbr.rel (%p545) target = $region92
        $region91: #{tpu_custom_call.1} parent=67 // pred_region
          %549 = dma.done [#allocation12], 512
        $region92: #{tpu_custom_call.1} parent=67 // pred_fallthru
          _
        // Predicated region
        $region93: #{tpu_custom_call.1} parent=67 // pred_check
          %p550 = pneg %p199
        $region94: #{tpu_custom_call.1} parent=67 // pred_check_branch
          %552 = sbr.rel (%p550) target = $region96
        $region95: #{tpu_custom_call.1} parent=67 // pred_region
          %554 = dma.done [#allocation12], 512
        $region96: #{tpu_custom_call.1} parent=67 // pred_fallthru
          _
        // Predicated region
        $region97: #{tpu_custom_call.1} parent=67 // pred_check
          %p555 = pneg %p220
        $region98: #{tpu_custom_call.1} parent=67 // pred_check_branch
          %557 = sbr.rel (%p555) target = $region100
        $region99: #{tpu_custom_call.1} parent=67 // pred_region
          %559 = dma.done [#allocation15], 512
        $region100: #{tpu_custom_call.1} parent=67 // pred_fallthru
          _
        %s560 = sand.u32 %s45, 1
        %s561 = scalar_lea.sflag [#allocation3], %s560
        %s562 = sand.u32 %s45, 1
        %s563 = smul.addr %s562, 8
        %s564 = scalar_lea.vmem [#allocation2], %s563
        %p565 = pneg %p58
        %p566 = pneg %p55
        %s567 = sand.u32 %s37, 1
        %s568 = scalar_lea.sflag [#allocation6], %s567
        %s569 = sand.u32 %s71, 1
        %s570 = smul.addr %s569, 8
        %s571 = scalar_lea.vmem [#allocation5], %s570
        %p572 = pneg %p84
        %p573 = pneg %p81
        %s574 = sand.u32 %s37, 1
        %s575 = scalar_lea.sflag [#allocation6], %s574
        %s576 = sand.u32 %s97, 1
        %s577 = smul.addr %s576, 8
        %s578 = scalar_lea.vmem [#allocation7], %s577
        %p579 = pneg %p110
        %p580 = pneg %p107
        %s581 = sand.u32 %s37, 1
        %s582 = scalar_lea.sflag [#allocation9], %s581
        %s583 = sand.u32 %s123, 1
        %s584 = smul.addr %s583, 8
        %s585 = scalar_lea.vmem [#allocation8], %s584
        %p586 = pneg %p136
        %p587 = pneg %p133
        %p588 = pneg %p157
        %p589 = pneg %p154
        %p590 = pneg %p178
        %p591 = pneg %p175
        %p592 = pneg %p199
        %p593 = pneg %p196
        %p594 = pneg %p220
        %p595 = pneg %p217
        %p596 = pneg %p241
        %p597 = pneg %p238
        %p598 = pneg %p262
        %p599 = pneg %p259
        %p600 = pneg %p283
        %p601 = pneg %p280
        %p602 = pneg %p304
        %p603 = pneg %p301
        %p604 = pneg %p330
        %p605 = pneg %p327
        %s606 = sand.u32 %s317, 1
        %s607 = scalar_lea.sflag [#allocation4], %s606
        %s608 = sand.u32 %s317, 1
        %s609 = smul.addr %s608, 8
        %s610 = scalar_lea.vmem [#allocation16], %s609
        %v611 = vld [vmem:[%s504] sm:$0xff]
        %v612 = vld [vmem:[%s514] sm:$0xff]
        %v613 = vld [vmem:[%s524] sm:$0xff]
        %v614 = vld [vmem:[#allocation10] sm:$0xff]
        %v615 = vld [vmem:[#allocation10 + $0x8] sm:$0xff]
        %v616 = vld [vmem:[#allocation10 + $0x10] sm:$0xff]
        %v617 = vld [vmem:[#allocation10 + $0x18] sm:$0xff]
        %v618 = vld [vmem:[%s8] sm:$0x1]
        %v620 = vperm.slane %v618, 0
        %vm622 = vcmask 261120
        %v624 = vsel %vm622, %v611, 0
        %626 = vmatpush.msra.mxu0 0.0
        %627 = vmatpush.msra.mxu0 0.0
        %628 = vmatpush.msra.mxu0 0.0
        %629 = vmatpush.msra.mxu0 0.0
        %630 = vmatpush.msra.mxu0 0.0
        %631 = vmatpush.msra.mxu0 0.0
        %632 = vmatpush.msra.mxu0 0.0
        %633 = vmatpush.msra.mxu0 0.0
        %634 = vmatpush.msra.mxu0 0.0
        %635 = vmatpush.msra.mxu0 0.0
        %636 = vmatpush.msra.mxu0 0.0
        %637 = vmatpush.msra.mxu0 0.0
        %638 = vmatpush.msra.mxu0 %v617
        %639 = vmatpush.msra.mxu0 %v616
        %640 = vmatpush.msra.mxu0 %v615
        %641 = vmatpush.msra.mxu0 %v614
        %642 = vmatmul.f32.gmra.mxu0 %v624
        %v643 = vpop.f32.mrf.mxu0
        %v644 = vadd.f32 %v620, %v643
        %645 = vdwg.mxu0
        %v646 = vmul.f32 %v644, 0.35355338
        %v647 = vld [vmem:[#allocation11] sm:$0xff]
        %v648 = vld [vmem:[#allocation11 + $0x8] sm:$0xff]
        %v649 = vld [vmem:[#allocation11 + $0x10] sm:$0xff]
        %v650 = vld [vmem:[#allocation11 + $0x18] sm:$0xff]
        %v651 = vld [vmem:[%s9] sm:$0x1]
        %v653 = vperm.slane %v651, 0
        %v656 = vsel %vm622, %v612, 0
        %658 = vmatpush.msra.mxu0 0.0
        %659 = vmatpush.msra.mxu0 0.0
        %660 = vmatpush.msra.mxu0 0.0
        %661 = vmatpush.msra.mxu0 0.0
        %662 = vmatpush.msra.mxu0 0.0
        %663 = vmatpush.msra.mxu0 0.0
        %664 = vmatpush.msra.mxu0 0.0
        %665 = vmatpush.msra.mxu0 0.0
        %666 = vmatpush.msra.mxu0 0.0
        %667 = vmatpush.msra.mxu0 0.0
        %668 = vmatpush.msra.mxu0 0.0
        %669 = vmatpush.msra.mxu0 0.0
        %670 = vmatpush.msra.mxu0 %v650
        %671 = vmatpush.msra.mxu0 %v649
        %672 = vmatpush.msra.mxu0 %v648
        %673 = vmatpush.msra.mxu0 %v647
        %674 = vmatmul.f32.gmra.mxu0 %v656
        %v675 = vpop.f32.mrf.mxu0
        %v676 = vadd.f32 %v653, %v675
        %677 = vdwg.mxu0
        %v678 = vld [vmem:[#allocation13] sm:$0xff]
        %v679 = vld [vmem:[#allocation13 + $0x8] sm:$0xff]
        %v680 = vld [vmem:[#allocation13 + $0x10] sm:$0xff]
        %v681 = vld [vmem:[#allocation13 + $0x18] sm:$0xff]
        %v682 = vld [vmem:[%s10] sm:$0x1]
        %v684 = vperm.slane %v682, 0
        %v687 = vsel %vm622, %v613, 0
        %689 = vmatpush.msra.mxu0 0.0
        %690 = vmatpush.msra.mxu0 0.0
        %691 = vmatpush.msra.mxu0 0.0
        %692 = vmatpush.msra.mxu0 0.0
        %693 = vmatpush.msra.mxu0 0.0
        %694 = vmatpush.msra.mxu0 0.0
        %695 = vmatpush.msra.mxu0 0.0
        %696 = vmatpush.msra.mxu0 0.0
        %697 = vmatpush.msra.mxu0 0.0
        %698 = vmatpush.msra.mxu0 0.0
        %699 = vmatpush.msra.mxu0 0.0
        %700 = vmatpush.msra.mxu0 0.0
        %701 = vmatpush.msra.mxu0 %v681
        %702 = vmatpush.msra.mxu0 %v680
        %703 = vmatpush.msra.mxu0 %v679
        %704 = vmatpush.msra.mxu0 %v678
        %705 = vmatmul.f32.gmra.mxu0 %v687
        %v706 = vpop.f32.mrf.mxu0
        %v707 = vadd.f32 %v684, %v706
        %708 = vdwg.mxu0
        %vm709 = vcmask 64512
        %v711 = vsel %vm709, %v646, 0
        %v714 = vsel %vm709, %v676, 0
        %716 = vmatpush.xpose.msra.mxu0 0.0
        %717 = vmatpush.xpose.msra.mxu0 0.0
        %718 = vmatpush.xpose.msra.mxu0 0.0
        %719 = vmatpush.xpose.msra.mxu0 0.0
        %720 = vmatpush.xpose.msra.mxu0 0.0
        %721 = vmatpush.xpose.msra.mxu0 0.0
        %722 = vmatpush.xpose.msra.mxu0 0.0
        %723 = vmatpush.xpose.msra.mxu0 0.0
        %724 = vmatpush.xpose.msra.mxu0 0.0
        %725 = vmatpush.xpose.msra.mxu0 0.0
        %726 = vmatpush.xpose.msra.mxu0 0.0
        %727 = vmatpush.xpose.msra.mxu0 0.0
        %728 = vmatpush.xpose.msra.mxu0 0.0
        %729 = vmatpush.xpose.msra.mxu0 0.0
        %730 = vmatpush.xpose.msra.mxu0 0.0
        %731 = vmatpush.xpose.msra.mxu0 %v714
        %732 = vmatmul.f32.gmra.mxu0 %v711
        %v733 = vpop.f32.mrf.mxu0
        %v734 = vadd.f32 0.0, %v733
        %735 = vdwg.mxu0
        %v736 = vld [vmem:[%s534] sm:$0xff]
        %vm737 = vcmp.eq.s32.totalorder %v736, 0
        %v738 = vsel %vm737, -1e+09, %v734
        %v739 = vsel %vm709, %v738, -inf
        %740 = vmax.xlane.f32.xlu0 %v739
        %v741 = vpop.xlane.xlu0 %740
        %v742 = vsub.f32 %v738, %v741
        %v743 = vmul.f32 %v742, 1.442695
        %v744 = vpow.pop %v743
        %v745 = vsel %vm709, %v744, 0.0
        %746 = vadd.xlane.f32.xlu0 %v745
        %v747 = vpop.xlane.xlu0 %746
        %v748 = vrcp.pop %v747
        %v749 = vmul.f32 %v744, %v748
        %v751 = vsel %vm709, %v749, 0
        %753 = vmatpush.msra.mxu0 0.0
        %754 = vmatpush.msra.mxu0 0.0
        %755 = vmatpush.msra.mxu0 0.0
        %756 = vmatpush.msra.mxu0 0.0
        %757 = vmatpush.msra.mxu0 0.0
        %758 = vmatpush.msra.mxu0 0.0
        %759 = vmatpush.msra.mxu0 0.0
        %760 = vmatpush.msra.mxu0 0.0
        %761 = vmatpush.msra.mxu0 0.0
        %762 = vmatpush.msra.mxu0 0.0
        %763 = vmatpush.msra.mxu0 0.0
        %764 = vmatpush.msra.mxu0 0.0
        %765 = vmatpush.msra.mxu0 0.0
        %766 = vmatpush.msra.mxu0 0.0
        %767 = vmatpush.msra.mxu0 0.0
        %768 = vmatpush.msra.mxu0 %v707
        %769 = vmatmul.f32.gmra.mxu0 %v751
        %v770 = vpop.f32.mrf.mxu0
        %v771 = vadd.f32 0.0, %v770
        %772 = vdwg.mxu0
        %773 = vrot.lane.b32.xlu0 %v646, 120
        %v774 = vpop.permute.xlu0 %773
        %775 = vrot.lane.b32.xlu0 %v676, 120
        %v776 = vpop.permute.xlu0 %775
        %v777 = vsel %vm709, %v774, 0
        %v779 = vsel %vm709, %v776, 0
        %781 = vmatpush.xpose.msra.mxu0 0.0
        %782 = vmatpush.xpose.msra.mxu0 0.0
        %783 = vmatpush.xpose.msra.mxu0 0.0
        %784 = vmatpush.xpose.msra.mxu0 0.0
        %785 = vmatpush.xpose.msra.mxu0 0.0
        %786 = vmatpush.xpose.msra.mxu0 0.0
        %787 = vmatpush.xpose.msra.mxu0 0.0
        %788 = vmatpush.xpose.msra.mxu0 0.0
        %789 = vmatpush.xpose.msra.mxu0 0.0
        %790 = vmatpush.xpose.msra.mxu0 0.0
        %791 = vmatpush.xpose.msra.mxu0 0.0
        %792 = vmatpush.xpose.msra.mxu0 0.0
        %793 = vmatpush.xpose.msra.mxu0 0.0
        %794 = vmatpush.xpose.msra.mxu0 0.0
        %795 = vmatpush.xpose.msra.mxu0 0.0
        %796 = vmatpush.xpose.msra.mxu0 %v779
        %797 = vmatmul.f32.gmra.mxu0 %v777
        %v798 = vpop.f32.mrf.mxu0
        %v799 = vadd.f32 0.0, %v798
        %800 = vdwg.mxu0
        %v801 = vsel %vm737, -1e+09, %v799
        %v802 = vsel %vm709, %v801, -inf
        %803 = vmax.xlane.f32.xlu0 %v802
        %v804 = vpop.xlane.xlu0 %803
        %v805 = vsub.f32 %v801, %v804
        %v806 = vmul.f32 %v805, 1.442695
        %v807 = vpow.pop %v806
        %v808 = vsel %vm709, %v807, 0.0
        %809 = vadd.xlane.f32.xlu0 %v808
        %v810 = vpop.xlane.xlu0 %809
        %v811 = vrcp.pop %v810
        %v812 = vmul.f32 %v807, %v811
        %814 = vrot.lane.b32.xlu0 %v707, 120
        %v815 = vpop.permute.xlu0 %814
        %v818 = vsel %vm709, %v812, 0
        %820 = vmatpush.msra.mxu0 0.0
        %821 = vmatpush.msra.mxu0 0.0
        %822 = vmatpush.msra.mxu0 0.0
        %823 = vmatpush.msra.mxu0 0.0
        %824 = vmatpush.msra.mxu0 0.0
        %825 = vmatpush.msra.mxu0 0.0
        %826 = vmatpush.msra.mxu0 0.0
        %827 = vmatpush.msra.mxu0 0.0
        %828 = vmatpush.msra.mxu0 0.0
        %829 = vmatpush.msra.mxu0 0.0
        %830 = vmatpush.msra.mxu0 0.0
        %831 = vmatpush.msra.mxu0 0.0
        %832 = vmatpush.msra.mxu0 0.0
        %833 = vmatpush.msra.mxu0 0.0
        %834 = vmatpush.msra.mxu0 0.0
        %835 = vmatpush.msra.mxu0 %v815
        %836 = vmatmul.f32.gmra.mxu0 %v818
        %v837 = vpop.f32.mrf.mxu0
        %v838 = vadd.f32 0.0, %v837
        %839 = vdwg.mxu0
        %840 = vrot.lane.b32.xlu0 %v646, 112
        %v841 = vpop.permute.xlu0 %840
        %842 = vrot.lane.b32.xlu0 %v676, 112
        %v843 = vpop.permute.xlu0 %842
        %v844 = vsel %vm709, %v841, 0
        %v846 = vsel %vm709, %v843, 0
        %848 = vmatpush.xpose.msra.mxu0 0.0
        %849 = vmatpush.xpose.msra.mxu0 0.0
        %850 = vmatpush.xpose.msra.mxu0 0.0
        %851 = vmatpush.xpose.msra.mxu0 0.0
        %852 = vmatpush.xpose.msra.mxu0 0.0
        %853 = vmatpush.xpose.msra.mxu0 0.0
        %854 = vmatpush.xpose.msra.mxu0 0.0
        %855 = vmatpush.xpose.msra.mxu0 0.0
        %856 = vmatpush.xpose.msra.mxu0 0.0
        %857 = vmatpush.xpose.msra.mxu0 0.0
        %858 = vmatpush.xpose.msra.mxu0 0.0
        %859 = vmatpush.xpose.msra.mxu0 0.0
        %860 = vmatpush.xpose.msra.mxu0 0.0
        %861 = vmatpush.xpose.msra.mxu0 0.0
        %862 = vmatpush.xpose.msra.mxu0 0.0
        %863 = vmatpush.xpose.msra.mxu0 %v846
        %864 = vmatmul.f32.gmra.mxu0 %v844
        %v865 = vpop.f32.mrf.mxu0
        %v866 = vadd.f32 0.0, %v865
        %867 = vdwg.mxu0
        %v868 = vsel %vm737, -1e+09, %v866
        %v869 = vsel %vm709, %v868, -inf
        %870 = vmax.xlane.f32.xlu0 %v869
        %v871 = vpop.xlane.xlu0 %870
        %v872 = vsub.f32 %v868, %v871
        %v873 = vmul.f32 %v872, 1.442695
        %v874 = vpow.pop %v873
        %v875 = vsel %vm709, %v874, 0.0
        %876 = vadd.xlane.f32.xlu0 %v875
        %v877 = vpop.xlane.xlu0 %876
        %v878 = vrcp.pop %v877
        %v879 = vmul.f32 %v874, %v878
        %880 = vrot.lane.b32.xlu0 %v707, 112
        %v881 = vpop.permute.xlu0 %880
        %v884 = vsel %vm709, %v879, 0
        %886 = vmatpush.msra.mxu0 0.0
        %887 = vmatpush.msra.mxu0 0.0
        %888 = vmatpush.msra.mxu0 0.0
        %889 = vmatpush.msra.mxu0 0.0
        %890 = vmatpush.msra.mxu0 0.0
        %891 = vmatpush.msra.mxu0 0.0
        %892 = vmatpush.msra.mxu0 0.0
        %893 = vmatpush.msra.mxu0 0.0
        %894 = vmatpush.msra.mxu0 0.0
        %895 = vmatpush.msra.mxu0 0.0
        %896 = vmatpush.msra.mxu0 0.0
        %897 = vmatpush.msra.mxu0 0.0
        %898 = vmatpush.msra.mxu0 0.0
        %899 = vmatpush.msra.mxu0 0.0
        %900 = vmatpush.msra.mxu0 0.0
        %901 = vmatpush.msra.mxu0 %v881
        %902 = vmatmul.f32.gmra.mxu0 %v884
        %v903 = vpop.f32.mrf.mxu0
        %v904 = vadd.f32 0.0, %v903
        %905 = vdwg.mxu0
        %906 = vrot.lane.b32.xlu0 %v646, 104
        %v907 = vpop.permute.xlu0 %906
        %908 = vrot.lane.b32.xlu0 %v676, 104
        %v909 = vpop.permute.xlu0 %908
        %v910 = vsel %vm709, %v907, 0
        %v912 = vsel %vm709, %v909, 0
        %914 = vmatpush.xpose.msra.mxu0 0.0
        %915 = vmatpush.xpose.msra.mxu0 0.0
        %916 = vmatpush.xpose.msra.mxu0 0.0
        %917 = vmatpush.xpose.msra.mxu0 0.0
        %918 = vmatpush.xpose.msra.mxu0 0.0
        %919 = vmatpush.xpose.msra.mxu0 0.0
        %920 = vmatpush.xpose.msra.mxu0 0.0
        %921 = vmatpush.xpose.msra.mxu0 0.0
        %922 = vmatpush.xpose.msra.mxu0 0.0
        %923 = vmatpush.xpose.msra.mxu0 0.0
        %924 = vmatpush.xpose.msra.mxu0 0.0
        %925 = vmatpush.xpose.msra.mxu0 0.0
        %926 = vmatpush.xpose.msra.mxu0 0.0
        %927 = vmatpush.xpose.msra.mxu0 0.0
        %928 = vmatpush.xpose.msra.mxu0 0.0
        %929 = vmatpush.xpose.msra.mxu0 %v912
        %930 = vmatmul.f32.gmra.mxu0 %v910
        %v931 = vpop.f32.mrf.mxu0
        %v932 = vadd.f32 0.0, %v931
        %933 = vdwg.mxu0
        %v934 = vsel %vm737, -1e+09, %v932
        %v935 = vsel %vm709, %v934, -inf
        %936 = vmax.xlane.f32.xlu0 %v935
        %v937 = vpop.xlane.xlu0 %936
        %v938 = vsub.f32 %v934, %v937
        %v939 = vmul.f32 %v938, 1.442695
        %v940 = vpow.pop %v939
        %v941 = vsel %vm709, %v940, 0.0
        %942 = vadd.xlane.f32.xlu0 %v941
        %v943 = vpop.xlane.xlu0 %942
        %v944 = vrcp.pop %v943
        %v945 = vmul.f32 %v940, %v944
        %946 = vrot.lane.b32.xlu0 %v707, 104
        %v947 = vpop.permute.xlu0 %946
        %v950 = vsel %vm709, %v945, 0
        %952 = vmatpush.msra.mxu0 0.0
        %953 = vmatpush.msra.mxu0 0.0
        %954 = vmatpush.msra.mxu0 0.0
        %955 = vmatpush.msra.mxu0 0.0
        %956 = vmatpush.msra.mxu0 0.0
        %957 = vmatpush.msra.mxu0 0.0
        %958 = vmatpush.msra.mxu0 0.0
        %959 = vmatpush.msra.mxu0 0.0
        %960 = vmatpush.msra.mxu0 0.0
        %961 = vmatpush.msra.mxu0 0.0
        %962 = vmatpush.msra.mxu0 0.0
        %963 = vmatpush.msra.mxu0 0.0
        %964 = vmatpush.msra.mxu0 0.0
        %965 = vmatpush.msra.mxu0 0.0
        %966 = vmatpush.msra.mxu0 0.0
        %967 = vmatpush.msra.mxu0 %v947
        %968 = vmatmul.f32.gmra.mxu0 %v950
        %v969 = vpop.f32.mrf.mxu0
        %v970 = vadd.f32 0.0, %v969
        %971 = vdwg.mxu0
        %973 = vrot.lane.b32.xlu0 %v838, 8
        %v974 = vpop.permute.xlu0 %973
        %977 = vrot.lane.b32.xlu0 %v904, 16
        %v978 = vpop.permute.xlu0 %977
        %981 = vrot.lane.b32.xlu0 %v970, 24
        %v982 = vpop.permute.xlu0 %981
        %v984 = vsel %vm709, %v771, %v974
        %vm985 = vcmask 130048
        %v986 = vsel %vm985, %v984, %v978
        %vm987 = vcmask 195584
        %v988 = vsel %vm987, %v986, %v982
        %v989 = vld [vmem:[#allocation14] sm:$0xff]
        %v990 = vld [vmem:[#allocation14 + $0x8] sm:$0xff]
        %v991 = vld [vmem:[#allocation14 + $0x10] sm:$0xff]
        %v992 = vld [vmem:[#allocation14 + $0x18] sm:$0xff]
        %v993 = vld [vmem:[%s11] sm:$0x1]
        %v995 = vperm.slane %v993, 0
        %v998 = vsel %vm622, %v988, 0
        %1000 = vmatpush.msra.mxu0 0.0
        %1001 = vmatpush.msra.mxu0 0.0
        %1002 = vmatpush.msra.mxu0 0.0
        %1003 = vmatpush.msra.mxu0 0.0
        %1004 = vmatpush.msra.mxu0 0.0
        %1005 = vmatpush.msra.mxu0 0.0
        %1006 = vmatpush.msra.mxu0 0.0
        %1007 = vmatpush.msra.mxu0 0.0
        %1008 = vmatpush.msra.mxu0 0.0
        %1009 = vmatpush.msra.mxu0 0.0
        %1010 = vmatpush.msra.mxu0 0.0
        %1011 = vmatpush.msra.mxu0 0.0
        %1012 = vmatpush.msra.mxu0 %v992
        %1013 = vmatpush.msra.mxu0 %v991
        %1014 = vmatpush.msra.mxu0 %v990
        %1015 = vmatpush.msra.mxu0 %v989
        %1016 = vmatmul.f32.gmra.mxu0 %v998
        %v1017 = vpop.f32.mrf.mxu0
        %v1018 = vadd.f32 %v995, %v1017
        %1019 = vdwg.mxu0
        %1020 = vst.msk [vmem:[%s610] sm:$0xff] %vm622, %v1018
        %s1021 = sand.u32 %s317, 1
        %s1022 = scalar_lea.sflag [#allocation4], %s1021
        %s1023 = sand.u32 %s317, 1
        %s1024 = smul.addr %s1023, 8
        %s1025 = scalar_lea.vmem [#allocation16], %s1024
        // Predicated region
        $region101: #{tpu_custom_call.1} parent=67 // pred_check
          %p1026 = pneg %p327
        $region102: #{tpu_custom_call.1} parent=67 // pred_check_branch
          %1028 = sbr.rel (%p1026) target = $region104
        $region103: #{tpu_custom_call.1} parent=67 // pred_region
          %1030 = vsyncadd %s1022, 0
          %s1031 = smul.addr %s37, 8
          %s1032 = scalar_lea.hbm %s12, %s1031
          %s1034 = sshll.u32 %s1025, 4
          %s1035 = int_to_ptr.vmem [resolvable:$true] %s1034
          %s1036 = sshll.u32 %s1032, 4
          %s1037 = int_to_ptr.hbm [resolvable:$true] %s1036
          %1039 = dma.vmem_to_hbm [thread:$0]  %s1035, 128, %s1037, %s1022
        $region104: #{tpu_custom_call.1} parent=67 // pred_fallthru
          _
      $region68: #{tpu_custom_call.1} parent=5 // pred_fallthru
        _
      %p1040 = scmp.le.s32.totalorder 2, %s32
      // Predicated region
      $region105: #{tpu_custom_call.1} parent=5 // pred_check
        %p1041 = pneg %p1040
      $region106: #{tpu_custom_call.1} parent=5 // pred_check_branch
        %1043 = sbr.rel (%p1041) target = $region108
      $region107: #{tpu_custom_call.1} parent=5 // pred_region
        %s1044 = ssub.s32 %s32, 2
        // Predicated region
        $region109: #{tpu_custom_call.1} parent=107 // pred_check
          %p1045 = pneg %p333
        $region110: #{tpu_custom_call.1} parent=107 // pred_check_branch
          %1047 = sbr.rel (%p1045) target = $region112
        $region111: #{tpu_custom_call.1} parent=107 // pred_region
          %s1048 = sand.u32 %s318, 1
          %s1049 = scalar_lea.sflag [#allocation4], %s1048
          %s1050 = sand.u32 %s318, 1
          %s1051 = smul.addr %s1050, 8
          %s1052 = scalar_lea.vmem [#allocation16], %s1051
          %1054 = dma.done %s1049, 128
        $region112: #{tpu_custom_call.1} parent=107 // pred_fallthru
          _
      $region108: #{tpu_custom_call.1} parent=5 // pred_fallthru
        _
    $region6: #{tpu_custom_call.1} parent=1 // loop_footer
      %s36 = sadd.s32 1, %s32
    $region7: #{tpu_custom_call.1} parent=1 // loop_footer_branch
      %31 = sbr.rel target = $region3
    $region8: #{tpu_custom_call.1} parent=1 // loop_exit
      _
    %1055 = vsyncpa [#allocation3], 1
    %s1056 = scalar_lea.sflag [#allocation3], 1
    %1057 = vsyncpa %s1056, 1
    %1058 = vsyncpa [#allocation6], 1
    %s1059 = scalar_lea.sflag [#allocation6], 1
    %1060 = vsyncpa %s1059, 1
    %1061 = vsyncpa [#allocation9], 1
    %s1062 = scalar_lea.sflag [#allocation9], 1
    %1063 = vsyncpa %s1062, 1
    %1064 = vsyncpa [#allocation12], 1
    %1065 = vsyncpa [#allocation15], 1
    %1066 = vsyncpa [#allocation4], 1
    %s1067 = scalar_lea.sflag [#allocation4], 1
    %1068 = vsyncpa %s1067, 1

</llo_original>
